<compile_context>
chip_gen: v7x
topology: tpu7x:2x2x1
jax: 0.10.0
libtpu: 0.0.40
codegen_flags: <defaults>
</compile_context>

<pallas_src>
import numpy as np
import jax
import jax.numpy as jnp
from jax.experimental import pallas as pl
from jax.experimental.pallas import tpu as pltpu

K_SIZE = 11

# Scoped-VMEM limit safe on every generation: v5e/v6e have 128 MiB physical,
# v7x only 64 MiB physical per TensorCore -> stay at 48 MiB.
_VMEM_LIMIT_BYTES = 48 * 1024 * 1024
# Fused kernel: per-grid-step x block budget; double-buffered in + out is
# ~4x this (<= 32 MiB), leaving headroom under the 48 MiB scoped limit.
_FUSED_BLOCK_BUDGET = 8 * 1024 * 1024
# Two-pass fallback tile budget (raised from 2 MiB; 1-4 MiB is the measured
# sweet spot; pass 2 double-buffers x + out -> ~16-17 MiB).
_TILE_BUDGET = 4 * 1024 * 1024


# ----------------------------------------------------------------------------
# Tiling helpers
# ----------------------------------------------------------------------------
def _divisors_desc(n):
    return [d for d in range(n, 0, -1) if n % d == 0]


def _pick_batch_block(batch, per_batch_bytes, budget):
    """Largest divisor of `batch` whose block fits `budget`, while keeping at
    least 2 grid steps along the batch axis when batch >= 2 (so v7x's two
    TensorCores both get work)."""
    for d in _divisors_desc(batch):
        if d * per_batch_bytes <= budget and (batch // d >= 2 or batch == 1):
            return d
    return 1


def _pick_tile_l(L, C, itemsize, budget_bytes=_TILE_BUDGET):
    """Largest multiple-of-128 divisor of L whose (C, TL) slab fits the budget.
    If nothing fits, take the smallest legal lane-dense tile (never silently
    the full extent for huge slabs); TL == L only when L has no 128-divisor."""
    cands = [t for t in range(128, L + 1, 128) if L % t == 0]
    fitting = [t for t in cands if C * t * itemsize <= budget_bytes]
    if fitting:
        return max(fitting)
    if cands:
        return min(cands)
    return L


def _pick_reduce_chunk(L):
    """Multiple-of-128 divisor of L giving <= 32 reduction chunks (caps the
    f32 temporary and unrolled code size); L itself if no such divisor."""
    best = None
    c = 128
    while c <= L:
        if L % c == 0:
            best = c
            if L // c <= 32:
                return c
        c *= 2
    return best if best is not None else L


# ----------------------------------------------------------------------------
# Shared gate math: Conv1d(1,1,K, pad=(K-1)//2, bias=False) over C + sigmoid
# ----------------------------------------------------------------------------
def _conv_sigmoid_gate(y, w_ref, k_size):
    """y: (BB, C) f32 channel means; w_ref: (K,) f32 in SMEM -> (BB, C) gate."""
    pad = (k_size - 1) // 2
    C = y.shape[-1]
    ch_idx = jax.lax.broadcasted_iota(jnp.int32, y.shape, 1)
    conv = jnp.zeros_like(y)
    for j in range(k_size):
        s = j - pad                                    # tap needs y[:, c + s]
        rolled = pltpu.roll(y, shift=(-s) % C, axis=1)
        valid = (ch_idx + s >= 0) & (ch_idx + s < C)   # zero padding at edges
        conv = conv + w_ref[j] * jnp.where(valid, rolled, 0.0)
    return jax.nn.sigmoid(conv)


# ----------------------------------------------------------------------------
# Fused single-pass kernel (read x once, write out once)
# ----------------------------------------------------------------------------
def _make_fused_kernel(L, k_size):
    inv_l = 1.0 / float(L)
    chunk = _pick_reduce_chunk(L)
    n_chunks = L // chunk

    def kernel(w_ref, x_ref, o_ref):
        # w_ref: (K,) SMEM (scalar prefetch); x_ref/o_ref: (BB, C, L) VMEM.
        # 1) mean over L in f32, chunked so the f32 temporary stays small.
        acc = jnp.sum(x_ref[:, :, 0:chunk].astype(jnp.float32), axis=-1)
        for j in range(1, n_chunks):
            acc = acc + jnp.sum(
                x_ref[:, :, j * chunk:(j + 1) * chunk].astype(jnp.float32),
                axis=-1)
        y = acc * inv_l                               # (BB, C) mean over L
        # 2) channel conv + sigmoid -> gate.
        gate = _conv_sigmoid_gate(y, w_ref, k_size)   # (BB, C) f32
        # 3) gating multiply in x's native dtype (reference multiplies in f32;
        #    identical for f32 inputs, one extra rounding step for bf16).
        x = x_ref[...]
        o_ref[...] = x * gate[:, :, None].astype(x.dtype)

    return kernel


def _eca_fused(x, w):
    B, C, L = x.shape
    k_size = int(w.shape[0])
    itemsize = x.dtype.itemsize
    slab = C * L * itemsize
    bb = _pick_batch_block(B, slab, _FUSED_BLOCK_BUDGET)

    return pl.pallas_call(
        _make_fused_kernel(L, k_size),
        out_shape=jax.ShapeDtypeStruct((B, C, L), x.dtype),
        grid_spec=pltpu.PrefetchScalarGridSpec(
            num_scalar_prefetch=1,                    # w -> SMEM before grid
            grid=(B // bb,),
            in_specs=[pl.BlockSpec((bb, C, L), lambda b, w_s: (b, 0, 0))],
            out_specs=pl.BlockSpec((bb, C, L), lambda b, w_s: (b, 0, 0)),
        ),
        compiler_params=pltpu.CompilerParams(
            dimension_semantics=("parallel",),
            vmem_limit_bytes=_VMEM_LIMIT_BYTES),
        cost_estimate=pl.CostEstimate(
            flops=2 * B * C * L + 2 * B * C * k_size,
            transcendentals=B * C,
            bytes_accessed=2 * B * C * L * itemsize),
    )(w, x)


# ----------------------------------------------------------------------------
# Two-pass fallback (per-batch slab too big for VMEM-resident fusion)
# ----------------------------------------------------------------------------
def _make_pool_gate_kernel(L, k_size, tl, lane_resident):
    inv_l = 1.0 / float(L)
    n128 = tl // 128 if tl % 128 == 0 else 0

    def kernel(w_ref, x_ref, gate_ref, acc_ref):
        # w_ref: (K,) SMEM; x_ref: (BB, C, TL) VMEM; gate_ref: (BB, C, 1) VMEM;
        # acc_ref: f32 VMEM scratch persisting across the L grid axis,
        #          (BB, C, 128) lane-resident or (BB, C).
        l = pl.program_id(1)

        @pl.when(l == 0)
        def _init():
            acc_ref[...] = jnp.zeros_like(acc_ref)

        if lane_resident:
            # VALU-only partial sums per tile; the single cross-lane (XLU)
            # reduction is deferred to the finalize block.
            part = x_ref[:, :, 0:128].astype(jnp.float32)
            for j in range(1, n128):
                part = part + x_ref[:, :, j * 128:(j + 1) * 128].astype(jnp.float32)
            acc_ref[...] += part
        else:
            acc_ref[...] += jnp.sum(x_ref[...].astype(jnp.float32), axis=-1)

        @pl.when(l == pl.num_programs(1) - 1)
        def _finalize():
            if lane_resident:
                y = jnp.sum(acc_ref[...], axis=-1) * inv_l     # (BB, C)
            else:
                y = acc_ref[...] * inv_l                       # (BB, C)
            gate_ref[...] = _conv_sigmoid_gate(y, w_ref, k_size)[:, :, None]

    return kernel


def _apply_gate_kernel(x_ref, gate_ref, o_ref):
    # x_ref/o_ref: (BB, C, TL); gate_ref: (BB, C, 1) f32.
    x = x_ref[...]
    o_ref[...] = x * gate_ref[...].astype(x.dtype)


def _eca_two_pass(x, w):
    B, C, L = x.shape
    k_size = int(w.shape[0])
    itemsize = x.dtype.itemsize
    tl = _pick_tile_l(L, C, itemsize)
    n_l = L // tl
    bb = _pick_batch_block(B, C * tl * itemsize, _TILE_BUDGET)
    lane_resident = (tl % 128 == 0) and (tl // 128 <= 64)
    acc_shape = (bb, C, 128) if lane_resident else (bb, C)

    # Pass 1: pooled mean over L -> channel conv -> sigmoid => gate (B, C, 1).
    # TODO(synk): with B == 1 this pass has a single "parallel" step, so one
    # v7x TensorCore idles for ~1/3 of the two-pass HBM traffic.
    gate = pl.pallas_call(
        _make_pool_gate_kernel(L, k_size, tl, lane_resident),
        out_shape=jax.ShapeDtypeStruct((B, C, 1), jnp.float32),
        grid_spec=pltpu.PrefetchScalarGridSpec(
            num_scalar_prefetch=1,                    # w -> SMEM before grid
            grid=(B // bb, n_l),
            in_specs=[pl.BlockSpec((bb, C, tl), lambda b, l, w_s: (b, 0, l))],
            out_specs=pl.BlockSpec((bb, C, 1), lambda b, l, w_s: (b, 0, 0)),
            scratch_shapes=[pltpu.VMEM(acc_shape, jnp.float32)],
        ),
        compiler_params=pltpu.CompilerParams(
            dimension_semantics=("parallel", "arbitrary"),
            vmem_limit_bytes=_VMEM_LIMIT_BYTES),
        cost_estimate=pl.CostEstimate(
            flops=B * C * L + 2 * B * C * k_size,
            transcendentals=B * C,
            bytes_accessed=B * C * L * itemsize + B * C * 4),
    )(w, x)

    # Pass 2: lane-dense streaming gating multiply, fully parallel grid.
    out = pl.pallas_call(
        _apply_gate_kernel,
        out_shape=jax.ShapeDtypeStruct((B, C, L), x.dtype),
        grid_spec=pltpu.PrefetchScalarGridSpec(
            num_scalar_prefetch=0,
            grid=(B // bb, n_l),
            in_specs=[pl.BlockSpec((bb, C, tl), lambda b, l: (b, 0, l)),
                      pl.BlockSpec((bb, C, 1), lambda b, l: (b, 0, 0))],
            out_specs=pl.BlockSpec((bb, C, tl), lambda b, l: (b, 0, l)),
        ),
        compiler_params=pltpu.CompilerParams(
            dimension_semantics=("parallel", "parallel"),
            vmem_limit_bytes=_VMEM_LIMIT_BYTES),
        cost_estimate=pl.CostEstimate(
            flops=B * C * L,
            transcendentals=0,
            bytes_accessed=2 * B * C * L * itemsize + B * C * 4),
    )(x, gate)
    return out


# ----------------------------------------------------------------------------
# Public entry point
# ----------------------------------------------------------------------------
def eca_forward(x, w, *, force_two_pass=False):
    """ECA forward: out = x * sigmoid(conv1d_K(mean_L(x))) for NCL input x."""
    _, C, L = x.shape
    slab = C * L * x.dtype.itemsize
    if not force_two_pass and slab <= _FUSED_BLOCK_BUDGET:
        return _eca_fused(x, w)        # read-once / write-once fused path
    return _eca_two_pass(x, w)         # streaming fallback for huge slabs


def eca_reference(x, w):
    # Pure-JAX reference mirroring the PyTorch forward.
    xf = x.astype(jnp.float32)
    y = jnp.mean(xf, axis=-1)                                  # (B, C)
    k = w.shape[0]
    pad = (k - 1) // 2
    yp = jnp.pad(y, ((0, 0), (pad, pad)))
    C = x.shape[1]
    conv = sum(w[j] * yp[:, j:j + C] for j in range(k))        # (B, C)
    gate = jax.nn.sigmoid(conv)
    return (xf * gate[:, :, None]).astype(x.dtype)


if __name__ == "__main__":
    key = jax.random.PRNGKey(0)
    kx, kw = jax.random.split(key)

    # Small but lane-dense shape (L multiple of 128) consistent with the module.
    B, C, L = 2, 64, 512
    x = jax.random.normal(kx, (B, C, L), dtype=jnp.float32)

    # Conv1d(1, 1, K, bias=False) weight, shape (1, 1, K) in torch -> (K,).
    bound = 1.0 / np.sqrt(K_SIZE)
    w = jax.random.uniform(kw, (K_SIZE,), minval=-bound, maxval=bound,
                           dtype=jnp.float32)

    ref = eca_reference(x, w)

    # Fused single-pass path (the default for this shape).
    out_fused = eca_forward(x, w)
    jax.block_until_ready(out_fused)
    np.testing.assert_allclose(np.asarray(out_fused), np.asarray(ref),
                               rtol=1e-5, atol=1e-5)

    # Two-pass fallback path (exercised explicitly so it stays correct).
    out_two = eca_forward(x, w, force_two_pass=True)
    jax.block_until_ready(out_two)
    np.testing.assert_allclose(np.asarray(out_two), np.asarray(ref),
                               rtol=1e-5, atol=1e-5)

    print("KERNEL_OK")
</pallas_src>

<mosaic_0001>
module attributes {stable_mosaic.version = 11 : i64} {
  func.func @kernel(%arg0: i32, %arg1: memref<11xf32, #tpu.memory_space<smem>>, %arg2: memref<1x64x512xf32, #tpu.memory_space<vmem>>, %arg3: memref<1x64x512xf32, #tpu.memory_space<vmem>>) attributes {dimension_semantics = [#tpu.dimension_semantics<parallel>], iteration_bounds = array<i64: 2>, scalar_prefetch = 1 : i64, scratch_operands = 0 : i64, tpu.core_type = #tpu.core_type<tc>, window_params = [{transform_indices = @transform_0, window_bounds = array<i64: 1, 64, 512>}, {transform_indices = @transform_1, window_bounds = array<i64: 1, 64, 512>}]} {
    %c0 = arith.constant 0 : index
    %c0_0 = arith.constant 0 : index
    %c0_1 = arith.constant 0 : index
    %0 = vector.load %arg2[%c0, %c0_0, %c0_1] : memref<1x64x512xf32, #tpu.memory_space<vmem>>, vector<1x64x128xf32>
    %cst = arith.constant dense<0.000000e+00> : vector<1x64xf32>
    %1 = vector.multi_reduction <add>, %0, %cst [2] : vector<1x64x128xf32> to vector<1x64xf32>
    %c0_2 = arith.constant 0 : index
    %c0_3 = arith.constant 0 : index
    %c128 = arith.constant 128 : index
    %2 = vector.load %arg2[%c0_2, %c0_3, %c128] : memref<1x64x512xf32, #tpu.memory_space<vmem>>, vector<1x64x128xf32>
    %cst_4 = arith.constant dense<0.000000e+00> : vector<1x64xf32>
    %3 = vector.multi_reduction <add>, %2, %cst_4 [2] : vector<1x64x128xf32> to vector<1x64xf32>
    %4 = arith.addf %1, %3 : vector<1x64xf32>
    %c0_5 = arith.constant 0 : index
    %c0_6 = arith.constant 0 : index
    %c256 = arith.constant 256 : index
    %5 = vector.load %arg2[%c0_5, %c0_6, %c256] : memref<1x64x512xf32, #tpu.memory_space<vmem>>, vector<1x64x128xf32>
    %cst_7 = arith.constant dense<0.000000e+00> : vector<1x64xf32>
    %6 = vector.multi_reduction <add>, %5, %cst_7 [2] : vector<1x64x128xf32> to vector<1x64xf32>
    %7 = arith.addf %4, %6 : vector<1x64xf32>
    %c0_8 = arith.constant 0 : index
    %c0_9 = arith.constant 0 : index
    %c384 = arith.constant 384 : index
    %8 = vector.load %arg2[%c0_8, %c0_9, %c384] : memref<1x64x512xf32, #tpu.memory_space<vmem>>, vector<1x64x128xf32>
    %cst_10 = arith.constant dense<0.000000e+00> : vector<1x64xf32>
    %9 = vector.multi_reduction <add>, %8, %cst_10 [2] : vector<1x64x128xf32> to vector<1x64xf32>
    %10 = arith.addf %7, %9 : vector<1x64xf32>
    %cst_11 = arith.constant 0.001953125 : f32
    %11 = vector.broadcast %cst_11 : f32 to vector<1x64xf32>
    %12 = arith.mulf %10, %11 : vector<1x64xf32>
    %13 = tpu.iota {dimensions = array<i32: 1>} : vector<1x64xi32>
    %cst_12 = arith.constant 0.000000e+00 : f32
    %14 = vector.broadcast %cst_12 : f32 to vector<1x64xf32>
    %c5_i32 = arith.constant 5 : i32
    %15 = tpu.dynamic_rotate %12 by %c5_i32 dim 1 : vector<1x64xf32>, i32 -> vector<1x64xf32>
    %c-5_i32 = arith.constant -5 : i32
    %16 = vector.broadcast %c-5_i32 : i32 to vector<1x64xi32>
    %17 = arith.addi %13, %16 : vector<1x64xi32>
    %c0_i32 = arith.constant 0 : i32
    %18 = vector.broadcast %c0_i32 : i32 to vector<1x64xi32>
    %19 = arith.cmpi sge, %17, %18 : vector<1x64xi32>
    %c-5_i32_13 = arith.constant -5 : i32
    %20 = vector.broadcast %c-5_i32_13 : i32 to vector<1x64xi32>
    %21 = arith.addi %13, %20 : vector<1x64xi32>
    %c64_i32 = arith.constant 64 : i32
    %22 = vector.broadcast %c64_i32 : i32 to vector<1x64xi32>
    %23 = arith.cmpi slt, %21, %22 : vector<1x64xi32>
    %24 = arith.andi %19, %23 : vector<1x64xi1>
    %c0_14 = arith.constant 0 : index
    %25 = memref.load %arg1[%c0_14] : memref<11xf32, #tpu.memory_space<smem>>
    %cst_15 = arith.constant 0.000000e+00 : f32
    %26 = vector.broadcast %cst_15 : f32 to vector<1x64xf32>
    %27 = arith.select %24, %15, %26 : vector<1x64xi1>, vector<1x64xf32>
    %28 = vector.broadcast %25 : f32 to vector<1x64xf32>
    %29 = arith.mulf %28, %27 : vector<1x64xf32>
    %30 = arith.addf %14, %29 : vector<1x64xf32>
    %c4_i32 = arith.constant 4 : i32
    %31 = tpu.dynamic_rotate %12 by %c4_i32 dim 1 : vector<1x64xf32>, i32 -> vector<1x64xf32>
    %c-4_i32 = arith.constant -4 : i32
    %32 = vector.broadcast %c-4_i32 : i32 to vector<1x64xi32>
    %33 = arith.addi %13, %32 : vector<1x64xi32>
    %c0_i32_16 = arith.constant 0 : i32
    %34 = vector.broadcast %c0_i32_16 : i32 to vector<1x64xi32>
    %35 = arith.cmpi sge, %33, %34 : vector<1x64xi32>
    %c-4_i32_17 = arith.constant -4 : i32
    %36 = vector.broadcast %c-4_i32_17 : i32 to vector<1x64xi32>
    %37 = arith.addi %13, %36 : vector<1x64xi32>
    %c64_i32_18 = arith.constant 64 : i32
    %38 = vector.broadcast %c64_i32_18 : i32 to vector<1x64xi32>
    %39 = arith.cmpi slt, %37, %38 : vector<1x64xi32>
    %40 = arith.andi %35, %39 : vector<1x64xi1>
    %c1 = arith.constant 1 : index
    %41 = memref.load %arg1[%c1] : memref<11xf32, #tpu.memory_space<smem>>
    %cst_19 = arith.constant 0.000000e+00 : f32
    %42 = vector.broadcast %cst_19 : f32 to vector<1x64xf32>
    %43 = arith.select %40, %31, %42 : vector<1x64xi1>, vector<1x64xf32>
    %44 = vector.broadcast %41 : f32 to vector<1x64xf32>
    %45 = arith.mulf %44, %43 : vector<1x64xf32>
    %46 = arith.addf %30, %45 : vector<1x64xf32>
    %c3_i32 = arith.constant 3 : i32
    %47 = tpu.dynamic_rotate %12 by %c3_i32 dim 1 : vector<1x64xf32>, i32 -> vector<1x64xf32>
    %c-3_i32 = arith.constant -3 : i32
    %48 = vector.broadcast %c-3_i32 : i32 to vector<1x64xi32>
    %49 = arith.addi %13, %48 : vector<1x64xi32>
    %c0_i32_20 = arith.constant 0 : i32
    %50 = vector.broadcast %c0_i32_20 : i32 to vector<1x64xi32>
    %51 = arith.cmpi sge, %49, %50 : vector<1x64xi32>
    %c-3_i32_21 = arith.constant -3 : i32
    %52 = vector.broadcast %c-3_i32_21 : i32 to vector<1x64xi32>
    %53 = arith.addi %13, %52 : vector<1x64xi32>
    %c64_i32_22 = arith.constant 64 : i32
    %54 = vector.broadcast %c64_i32_22 : i32 to vector<1x64xi32>
    %55 = arith.cmpi slt, %53, %54 : vector<1x64xi32>
    %56 = arith.andi %51, %55 : vector<1x64xi1>
    %c2 = arith.constant 2 : index
    %57 = memref.load %arg1[%c2] : memref<11xf32, #tpu.memory_space<smem>>
    %cst_23 = arith.constant 0.000000e+00 : f32
    %58 = vector.broadcast %cst_23 : f32 to vector<1x64xf32>
    %59 = arith.select %56, %47, %58 : vector<1x64xi1>, vector<1x64xf32>
    %60 = vector.broadcast %57 : f32 to vector<1x64xf32>
    %61 = arith.mulf %60, %59 : vector<1x64xf32>
    %62 = arith.addf %46, %61 : vector<1x64xf32>
    %c2_i32 = arith.constant 2 : i32
    %63 = tpu.dynamic_rotate %12 by %c2_i32 dim 1 : vector<1x64xf32>, i32 -> vector<1x64xf32>
    %c-2_i32 = arith.constant -2 : i32
    %64 = vector.broadcast %c-2_i32 : i32 to vector<1x64xi32>
    %65 = arith.addi %13, %64 : vector<1x64xi32>
    %c0_i32_24 = arith.constant 0 : i32
    %66 = vector.broadcast %c0_i32_24 : i32 to vector<1x64xi32>
    %67 = arith.cmpi sge, %65, %66 : vector<1x64xi32>
    %c-2_i32_25 = arith.constant -2 : i32
    %68 = vector.broadcast %c-2_i32_25 : i32 to vector<1x64xi32>
    %69 = arith.addi %13, %68 : vector<1x64xi32>
    %c64_i32_26 = arith.constant 64 : i32
    %70 = vector.broadcast %c64_i32_26 : i32 to vector<1x64xi32>
    %71 = arith.cmpi slt, %69, %70 : vector<1x64xi32>
    %72 = arith.andi %67, %71 : vector<1x64xi1>
    %c3 = arith.constant 3 : index
    %73 = memref.load %arg1[%c3] : memref<11xf32, #tpu.memory_space<smem>>
    %cst_27 = arith.constant 0.000000e+00 : f32
    %74 = vector.broadcast %cst_27 : f32 to vector<1x64xf32>
    %75 = arith.select %72, %63, %74 : vector<1x64xi1>, vector<1x64xf32>
    %76 = vector.broadcast %73 : f32 to vector<1x64xf32>
    %77 = arith.mulf %76, %75 : vector<1x64xf32>
    %78 = arith.addf %62, %77 : vector<1x64xf32>
    %c1_i32 = arith.constant 1 : i32
    %79 = tpu.dynamic_rotate %12 by %c1_i32 dim 1 : vector<1x64xf32>, i32 -> vector<1x64xf32>
    %c-1_i32 = arith.constant -1 : i32
    %80 = vector.broadcast %c-1_i32 : i32 to vector<1x64xi32>
    %81 = arith.addi %13, %80 : vector<1x64xi32>
    %c0_i32_28 = arith.constant 0 : i32
    %82 = vector.broadcast %c0_i32_28 : i32 to vector<1x64xi32>
    %83 = arith.cmpi sge, %81, %82 : vector<1x64xi32>
    %c-1_i32_29 = arith.constant -1 : i32
    %84 = vector.broadcast %c-1_i32_29 : i32 to vector<1x64xi32>
    %85 = arith.addi %13, %84 : vector<1x64xi32>
    %c64_i32_30 = arith.constant 64 : i32
    %86 = vector.broadcast %c64_i32_30 : i32 to vector<1x64xi32>
    %87 = arith.cmpi slt, %85, %86 : vector<1x64xi32>
    %88 = arith.andi %83, %87 : vector<1x64xi1>
    %c4 = arith.constant 4 : index
    %89 = memref.load %arg1[%c4] : memref<11xf32, #tpu.memory_space<smem>>
    %cst_31 = arith.constant 0.000000e+00 : f32
    %90 = vector.broadcast %cst_31 : f32 to vector<1x64xf32>
    %91 = arith.select %88, %79, %90 : vector<1x64xi1>, vector<1x64xf32>
    %92 = vector.broadcast %89 : f32 to vector<1x64xf32>
    %93 = arith.mulf %92, %91 : vector<1x64xf32>
    %94 = arith.addf %78, %93 : vector<1x64xf32>
    %c0_i32_32 = arith.constant 0 : i32
    %95 = tpu.dynamic_rotate %12 by %c0_i32_32 dim 1 : vector<1x64xf32>, i32 -> vector<1x64xf32>
    %c0_i32_33 = arith.constant 0 : i32
    %96 = vector.broadcast %c0_i32_33 : i32 to vector<1x64xi32>
    %97 = arith.addi %13, %96 : vector<1x64xi32>
    %c0_i32_34 = arith.constant 0 : i32
    %98 = vector.broadcast %c0_i32_34 : i32 to vector<1x64xi32>
    %99 = arith.cmpi sge, %97, %98 : vector<1x64xi32>
    %c0_i32_35 = arith.constant 0 : i32
    %100 = vector.broadcast %c0_i32_35 : i32 to vector<1x64xi32>
    %101 = arith.addi %13, %100 : vector<1x64xi32>
    %c64_i32_36 = arith.constant 64 : i32
    %102 = vector.broadcast %c64_i32_36 : i32 to vector<1x64xi32>
    %103 = arith.cmpi slt, %101, %102 : vector<1x64xi32>
    %104 = arith.andi %99, %103 : vector<1x64xi1>
    %c5 = arith.constant 5 : index
    %105 = memref.load %arg1[%c5] : memref<11xf32, #tpu.memory_space<smem>>
    %cst_37 = arith.constant 0.000000e+00 : f32
    %106 = vector.broadcast %cst_37 : f32 to vector<1x64xf32>
    %107 = arith.select %104, %95, %106 : vector<1x64xi1>, vector<1x64xf32>
    %108 = vector.broadcast %105 : f32 to vector<1x64xf32>
    %109 = arith.mulf %108, %107 : vector<1x64xf32>
    %110 = arith.addf %94, %109 : vector<1x64xf32>
    %c63_i32 = arith.constant 63 : i32
    %111 = tpu.dynamic_rotate %12 by %c63_i32 dim 1 : vector<1x64xf32>, i32 -> vector<1x64xf32>
    %c1_i32_38 = arith.constant 1 : i32
    %112 = vector.broadcast %c1_i32_38 : i32 to vector<1x64xi32>
    %113 = arith.addi %13, %112 : vector<1x64xi32>
    %c0_i32_39 = arith.constant 0 : i32
    %114 = vector.broadcast %c0_i32_39 : i32 to vector<1x64xi32>
    %115 = arith.cmpi sge, %113, %114 : vector<1x64xi32>
    %c1_i32_40 = arith.constant 1 : i32
    %116 = vector.broadcast %c1_i32_40 : i32 to vector<1x64xi32>
    %117 = arith.addi %13, %116 : vector<1x64xi32>
    %c64_i32_41 = arith.constant 64 : i32
    %118 = vector.broadcast %c64_i32_41 : i32 to vector<1x64xi32>
    %119 = arith.cmpi slt, %117, %118 : vector<1x64xi32>
    %120 = arith.andi %115, %119 : vector<1x64xi1>
    %c6 = arith.constant 6 : index
    %121 = memref.load %arg1[%c6] : memref<11xf32, #tpu.memory_space<smem>>
    %cst_42 = arith.constant 0.000000e+00 : f32
    %122 = vector.broadcast %cst_42 : f32 to vector<1x64xf32>
    %123 = arith.select %120, %111, %122 : vector<1x64xi1>, vector<1x64xf32>
    %124 = vector.broadcast %121 : f32 to vector<1x64xf32>
    %125 = arith.mulf %124, %123 : vector<1x64xf32>
    %126 = arith.addf %110, %125 : vector<1x64xf32>
    %c62_i32 = arith.constant 62 : i32
    %127 = tpu.dynamic_rotate %12 by %c62_i32 dim 1 : vector<1x64xf32>, i32 -> vector<1x64xf32>
    %c2_i32_43 = arith.constant 2 : i32
    %128 = vector.broadcast %c2_i32_43 : i32 to vector<1x64xi32>
    %129 = arith.addi %13, %128 : vector<1x64xi32>
    %c0_i32_44 = arith.constant 0 : i32
    %130 = vector.broadcast %c0_i32_44 : i32 to vector<1x64xi32>
    %131 = arith.cmpi sge, %129, %130 : vector<1x64xi32>
    %c2_i32_45 = arith.constant 2 : i32
    %132 = vector.broadcast %c2_i32_45 : i32 to vector<1x64xi32>
    %133 = arith.addi %13, %132 : vector<1x64xi32>
    %c64_i32_46 = arith.constant 64 : i32
    %134 = vector.broadcast %c64_i32_46 : i32 to vector<1x64xi32>
    %135 = arith.cmpi slt, %133, %134 : vector<1x64xi32>
    %136 = arith.andi %131, %135 : vector<1x64xi1>
    %c7 = arith.constant 7 : index
    %137 = memref.load %arg1[%c7] : memref<11xf32, #tpu.memory_space<smem>>
    %cst_47 = arith.constant 0.000000e+00 : f32
    %138 = vector.broadcast %cst_47 : f32 to vector<1x64xf32>
    %139 = arith.select %136, %127, %138 : vector<1x64xi1>, vector<1x64xf32>
    %140 = vector.broadcast %137 : f32 to vector<1x64xf32>
    %141 = arith.mulf %140, %139 : vector<1x64xf32>
    %142 = arith.addf %126, %141 : vector<1x64xf32>
    %c61_i32 = arith.constant 61 : i32
    %143 = tpu.dynamic_rotate %12 by %c61_i32 dim 1 : vector<1x64xf32>, i32 -> vector<1x64xf32>
    %c3_i32_48 = arith.constant 3 : i32
    %144 = vector.broadcast %c3_i32_48 : i32 to vector<1x64xi32>
    %145 = arith.addi %13, %144 : vector<1x64xi32>
    %c0_i32_49 = arith.constant 0 : i32
    %146 = vector.broadcast %c0_i32_49 : i32 to vector<1x64xi32>
    %147 = arith.cmpi sge, %145, %146 : vector<1x64xi32>
    %c3_i32_50 = arith.constant 3 : i32
    %148 = vector.broadcast %c3_i32_50 : i32 to vector<1x64xi32>
    %149 = arith.addi %13, %148 : vector<1x64xi32>
    %c64_i32_51 = arith.constant 64 : i32
    %150 = vector.broadcast %c64_i32_51 : i32 to vector<1x64xi32>
    %151 = arith.cmpi slt, %149, %150 : vector<1x64xi32>
    %152 = arith.andi %147, %151 : vector<1x64xi1>
    %c8 = arith.constant 8 : index
    %153 = memref.load %arg1[%c8] : memref<11xf32, #tpu.memory_space<smem>>
    %cst_52 = arith.constant 0.000000e+00 : f32
    %154 = vector.broadcast %cst_52 : f32 to vector<1x64xf32>
    %155 = arith.select %152, %143, %154 : vector<1x64xi1>, vector<1x64xf32>
    %156 = vector.broadcast %153 : f32 to vector<1x64xf32>
    %157 = arith.mulf %156, %155 : vector<1x64xf32>
    %158 = arith.addf %142, %157 : vector<1x64xf32>
    %c60_i32 = arith.constant 60 : i32
    %159 = tpu.dynamic_rotate %12 by %c60_i32 dim 1 : vector<1x64xf32>, i32 -> vector<1x64xf32>
    %c4_i32_53 = arith.constant 4 : i32
    %160 = vector.broadcast %c4_i32_53 : i32 to vector<1x64xi32>
    %161 = arith.addi %13, %160 : vector<1x64xi32>
    %c0_i32_54 = arith.constant 0 : i32
    %162 = vector.broadcast %c0_i32_54 : i32 to vector<1x64xi32>
    %163 = arith.cmpi sge, %161, %162 : vector<1x64xi32>
    %c4_i32_55 = arith.constant 4 : i32
    %164 = vector.broadcast %c4_i32_55 : i32 to vector<1x64xi32>
    %165 = arith.addi %13, %164 : vector<1x64xi32>
    %c64_i32_56 = arith.constant 64 : i32
    %166 = vector.broadcast %c64_i32_56 : i32 to vector<1x64xi32>
    %167 = arith.cmpi slt, %165, %166 : vector<1x64xi32>
    %168 = arith.andi %163, %167 : vector<1x64xi1>
    %c9 = arith.constant 9 : index
    %169 = memref.load %arg1[%c9] : memref<11xf32, #tpu.memory_space<smem>>
    %cst_57 = arith.constant 0.000000e+00 : f32
    %170 = vector.broadcast %cst_57 : f32 to vector<1x64xf32>
    %171 = arith.select %168, %159, %170 : vector<1x64xi1>, vector<1x64xf32>
    %172 = vector.broadcast %169 : f32 to vector<1x64xf32>
    %173 = arith.mulf %172, %171 : vector<1x64xf32>
    %174 = arith.addf %158, %173 : vector<1x64xf32>
    %c59_i32 = arith.constant 59 : i32
    %175 = tpu.dynamic_rotate %12 by %c59_i32 dim 1 : vector<1x64xf32>, i32 -> vector<1x64xf32>
    %c5_i32_58 = arith.constant 5 : i32
    %176 = vector.broadcast %c5_i32_58 : i32 to vector<1x64xi32>
    %177 = arith.addi %13, %176 : vector<1x64xi32>
    %c0_i32_59 = arith.constant 0 : i32
    %178 = vector.broadcast %c0_i32_59 : i32 to vector<1x64xi32>
    %179 = arith.cmpi sge, %177, %178 : vector<1x64xi32>
    %c5_i32_60 = arith.constant 5 : i32
    %180 = vector.broadcast %c5_i32_60 : i32 to vector<1x64xi32>
    %181 = arith.addi %13, %180 : vector<1x64xi32>
    %c64_i32_61 = arith.constant 64 : i32
    %182 = vector.broadcast %c64_i32_61 : i32 to vector<1x64xi32>
    %183 = arith.cmpi slt, %181, %182 : vector<1x64xi32>
    %184 = arith.andi %179, %183 : vector<1x64xi1>
    %c10 = arith.constant 10 : index
    %185 = memref.load %arg1[%c10] : memref<11xf32, #tpu.memory_space<smem>>
    %cst_62 = arith.constant 0.000000e+00 : f32
    %186 = vector.broadcast %cst_62 : f32 to vector<1x64xf32>
    %187 = arith.select %184, %175, %186 : vector<1x64xi1>, vector<1x64xf32>
    %188 = vector.broadcast %185 : f32 to vector<1x64xf32>
    %189 = arith.mulf %188, %187 : vector<1x64xf32>
    %190 = arith.addf %174, %189 : vector<1x64xf32>
    %191 = arith.negf %190 : vector<1x64xf32>
    %192 = math.exp %191 : vector<1x64xf32>
    %cst_63 = arith.constant 1.000000e+00 : f32
    %193 = vector.broadcast %cst_63 : f32 to vector<1x64xf32>
    %194 = arith.addf %193, %192 : vector<1x64xf32>
    %195 = arith.divf %193, %194 : vector<1x64xf32>
    %c0_64 = arith.constant 0 : index
    %c0_65 = arith.constant 0 : index
    %c0_66 = arith.constant 0 : index
    %196 = vector.load %arg2[%c0_64, %c0_65, %c0_66] : memref<1x64x512xf32, #tpu.memory_space<vmem>>, vector<1x64x512xf32>
    %197 = vector.shape_cast %195 : vector<1x64xf32> to vector<1x64x1xf32>
    %198 = vector.broadcast %197 : vector<1x64x1xf32> to vector<1x64x512xf32>
    %199 = arith.mulf %196, %198 : vector<1x64x512xf32>
    %c0_67 = arith.constant 0 : index
    %c0_68 = arith.constant 0 : index
    %c0_69 = arith.constant 0 : index
    %200 = vector.load %arg3[%c0_67, %c0_68, %c0_69] : memref<1x64x512xf32, #tpu.memory_space<vmem>>, vector<1x64x512xf32>
    tpu.vector_store %arg3[%c0_67, %c0_68, %c0_69], %199 {strides = array<i32>} : memref<1x64x512xf32, #tpu.memory_space<vmem>>, vector<1x64x512xf32>,
    return
  }
  func.func @transform_0(%arg0: i32, %arg1: memref<11xf32, #tpu.memory_space<smem>>) -> (i32, i32, i32) {
    %c0_i32 = arith.constant 0 : i32
    %c0_i32_0 = arith.constant 0 : i32
    %c0_i32_1 = arith.constant 0 : i32
    return %arg0, %c0_i32, %c0_i32_0 : i32, i32, i32
  }
  func.func @transform_1(%arg0: i32, %arg1: memref<11xf32, #tpu.memory_space<smem>>) -> (i32, i32, i32) {
    %c0_i32 = arith.constant 0 : i32
    %c0_i32_0 = arith.constant 0 : i32
    %c0_i32_1 = arith.constant 0 : i32
    return %arg0, %c0_i32, %c0_i32_0 : i32, i32, i32
  }
}

</mosaic_0001>

<llo_original>
// kernel: tpu_custom_call.1
$region0: #{tpu_custom_call.1}
  #allocation0 [shape = 'u32[]', space=smem, size = 0x4, offset = 0x4, fixed_abs, tag = 'smem constant byte address 0x4 - core index']
  #allocation1 [shape = 'u32[144,128]{1,0:T(1,128)}', space=vmem, size = 0x12000, scoped, tag = 'internal scratch']
  #allocation2 [shape = 's32[1]{0}', space=sflag, size = 0x4, scoped, tag = 'scoped memory for tpu_custom_call.1']
  #allocation3 [shape = 'u8[512]{0}', space=smem, size = 0x200, scoped, tag = 'prefetched SMEM operand 0']
  %s0 = inlined_call_operand.hbm [shape: f32[11], index: 0, kind: input, shape index: {}]
  %s1 = inlined_call_operand.hbm [shape: f32[2,64,512], index: 1, kind: input, shape index: {}]
  %s2 = inlined_call_operand.hbm [shape: f32[2,64,512], index: 2, kind: output, shape index: {}]
  %s3 = sld [smem:[#allocation0]]
  $region41: #{tpu_custom_call.1} parent=0
    _
  %s5 = ssub.s32 1, %s3
  %s6 = scalar_select 0, %s5, %s3
  %8 = dma.hbm_to_smem %s0, 16, [#allocation3], [#allocation2]
  %9 = dma.done [#allocation2], 16
  %10 = sfence
  $region1: #{tpu_custom_call.1} parent=0
    #allocation4 [shape = 'u8[262144]{0}', space=vmem, size = 0x40000, scoped, tag = 'input window, operand 1']
    #allocation5 [shape = 's32[2]{0}', space=sflag, size = 0x8, scoped, tag = 'scoped memory for tpu_custom_call.1']
    #allocation6 [shape = 's32[2]{0}', space=sflag, size = 0x8, scoped, tag = 'scoped memory for tpu_custom_call.1']
    #allocation7 [shape = 'u8[262144]{0}', space=vmem, size = 0x40000, scoped, tag = 'output window, operand 0']
    %11 = vsyncpa [#allocation5], 0
    %s12 = scalar_lea.sflag [#allocation5], 1
    %13 = vsyncpa %s12, 0
    %14 = vsyncpa [#allocation6], 0
    %s15 = scalar_lea.sflag [#allocation6], 1
    %16 = vsyncpa %s15, 0
    loop: start=0, step=1, limit=4
    $region2: #{tpu_custom_call.1} parent=1 // loop_pre_header
      _
    $region3: #{tpu_custom_call.1} parent=1 // loop_header
      %s18 = sphi 0, %s22
      %p19 = scmp.ge.s32.totalorder %s18, 4
      %s28 = sphi 0, %s30
      %s31 = sphi 0, %s28
      %s32 = sphi 0, %s31
      %s48 = sphi 0, %s32
      %s54 = sphi 0, %s56
      %s57 = sphi 0, %s54
      %s58 = sphi 0, %s57
      %s74 = sphi 0, %s58
    $region4: #{tpu_custom_call.1} parent=1 // loop_header_branch
      %21 = sbr.rel (%p19) target = $region8
    $region5: #{tpu_custom_call.1} parent=1 // loop_body
      %s23 = ssub.s32 %s18, 1
      %s24 = ssub.s32 %s18, 2
      %s25 = sadd.s32 %s18, 1
      %s26 = ssub.s32 %s18, %s25
      %p27 = scmp.eq.s32.totalorder %s26, 0
      %s29 = sadd.s32 %s28, 1
      %s30 = scalar_select %p27, %s28, %s29
      %p33 = pneg %p27
      %p34 = scmp.eq.s32.totalorder %s18, 1
      %p35 = por %p33, %p34
      %p36 = scmp.ne.s32.totalorder %s28, %s31
      %p37 = scmp.eq.s32.totalorder %s18, 0
      %p38 = por %p36, %p37
      %p39 = scmp.ne.s32.totalorder %s28, %s31
      %p40 = scmp.eq.s32.totalorder %s23, 1
      %p41 = por %p39, %p40
      %p42 = scmp.ne.s32.totalorder %s31, %s32
      %p43 = scmp.eq.s32.totalorder %s23, 0
      %p44 = por %p42, %p43
      %p45 = scmp.ne.s32.totalorder %s31, %s32
      %p46 = scmp.eq.s32.totalorder %s24, 1
      %p47 = por %p45, %p46
      %p49 = scmp.ne.s32.totalorder %s32, %s48
      %p50 = scmp.eq.s32.totalorder %s24, 0
      %p51 = por %p49, %p50
      %s52 = ssub.s32 %s18, %s25
      %p53 = scmp.eq.s32.totalorder %s52, 0
      %s55 = sadd.s32 %s54, 1
      %s56 = scalar_select %p53, %s54, %s55
      %p59 = pneg %p53
      %p60 = scmp.eq.s32.totalorder %s18, 1
      %p61 = por %p59, %p60
      %p62 = scmp.ne.s32.totalorder %s54, %s57
      %p63 = scmp.eq.s32.totalorder %s18, 0
      %p64 = por %p62, %p63
      %p65 = scmp.ne.s32.totalorder %s54, %s57
      %p66 = scmp.eq.s32.totalorder %s23, 1
      %p67 = por %p65, %p66
      %p68 = scmp.ne.s32.totalorder %s57, %s58
      %p69 = scmp.eq.s32.totalorder %s23, 0
      %p70 = por %p68, %p69
      %p71 = scmp.ne.s32.totalorder %s57, %s58
      %p72 = scmp.eq.s32.totalorder %s24, 1
      %p73 = por %p71, %p72
      %p75 = scmp.ne.s32.totalorder %s58, %s74
      %p76 = scmp.eq.s32.totalorder %s24, 0
      %p77 = por %p75, %p76
      %p78 = scmp.le.s32.totalorder 1, %s18
      %p79 = scmp.lt.s32.totalorder %s18, 3
      %p80 = pnand %p78, %p79
      %p81 = pneg %p80
      // Predicated region
      $region9: #{tpu_custom_call.1} parent=5 // pred_check
        _
      $region10: #{tpu_custom_call.1} parent=5 // pred_check_branch
        %83 = sbr.rel (%p80) target = $region12
      $region11: #{tpu_custom_call.1} parent=5 // pred_region
        %s84 = ssub.s32 %s18, 1
      $region12: #{tpu_custom_call.1} parent=5 // pred_fallthru
        _
      %p85 = scmp.lt.s32.totalorder %s18, 2
      // Predicated region
      $region13: #{tpu_custom_call.1} parent=5 // pred_check
        %p86 = pneg %p85
      $region14: #{tpu_custom_call.1} parent=5 // pred_check_branch
        %88 = sbr.rel (%p86) target = $region16
      $region15: #{tpu_custom_call.1} parent=5 // pred_region
        // Predicated region
        $region17: #{tpu_custom_call.1} parent=15 // pred_check
          %p89 = pneg %p38
        $region18: #{tpu_custom_call.1} parent=15 // pred_check_branch
          %91 = sbr.rel (%p89) target = $region20
        $region19: #{tpu_custom_call.1} parent=15 // pred_region
          %s92 = sand.u32 %s28, 1
          %s93 = scalar_lea.sflag [#allocation5], %s92
          %s94 = sand.u32 %s28, 1
          %s95 = smul.addr %s94, 256
          %s96 = scalar_lea.vmem [#allocation4], %s95
          %s98 = ssub.s32 4096, 4096
          %99 = vsyncadd %s93, %s98
          %s100 = smul.addr %s18, 32
          %s101 = smul.addr %s100, 128
          %s102 = scalar_lea.hbm %s1, %s101
          %s103 = sshll.u32 %s96, 4
          %s104 = int_to_ptr.vmem [resolvable:$true] %s103
          %109 = dma.hbm_to_vmem [thread:$0]  %s102, 4096, %s104, %s93, 512, 512, 32
        $region20: #{tpu_custom_call.1} parent=15 // pred_fallthru
          _
      $region16: #{tpu_custom_call.1} parent=5 // pred_fallthru
        _
      %p110 = scmp.le.s32.totalorder 1, %s18
      %p111 = scmp.lt.s32.totalorder %s18, 3
      %p112 = pnand %p110, %p111
      %p113 = pneg %p112
      // Predicated region
      $region21: #{tpu_custom_call.1} parent=5 // pred_check
        _
      $region22: #{tpu_custom_call.1} parent=5 // pred_check_branch
        %115 = sbr.rel (%p112) target = $region24
      $region23: #{tpu_custom_call.1} parent=5 // pred_region
        %s116 = ssub.s32 %s18, 1
        %s117 = sand.u32 %s31, 1
        %s118 = scalar_lea.sflag [#allocation5], %s117
        %s119 = sand.u32 %s31, 1
        %s120 = smul.addr %s119, 256
        %s121 = scalar_lea.vmem [#allocation4], %s120
        // Predicated region
        $region25: #{tpu_custom_call.1} parent=23 // pred_check
          %p122 = pneg %p44
        $region26: #{tpu_custom_call.1} parent=23 // pred_check_branch
          %124 = sbr.rel (%p122) target = $region28
        $region27: #{tpu_custom_call.1} parent=23 // pred_region
          %125 = dma.done %s118, 4096
        $region28: #{tpu_custom_call.1} parent=23 // pred_fallthru
          _
        %s126 = sand.u32 %s31, 1
        %s127 = scalar_lea.sflag [#allocation5], %s126
        %s128 = sand.u32 %s31, 1
        %s129 = smul.addr %s128, 256
        %s130 = scalar_lea.vmem [#allocation4], %s129
        %p131 = pneg %p44
        %p132 = pneg %p41
        %p133 = pneg %p70
        %p134 = pneg %p67
        %s135 = sand.u32 %s57, 1
        %s136 = scalar_lea.sflag [#allocation6], %s135
        %s137 = sand.u32 %s57, 1
        %s138 = smul.addr %s137, 256
        %s139 = scalar_lea.vmem [#allocation7], %s138
        %v140 = vld [vmem:[%s121] sm:$0xff]
        %v141 = vld [vmem:[%s121 + $0x20] sm:$0xff]
        %v142 = vld [vmem:[%s121 + $0x40] sm:$0xff]
        %v143 = vld [vmem:[%s121 + $0x60] sm:$0xff]
        %v144 = vld [vmem:[%s121 + $0x80] sm:$0xff]
        %v145 = vld [vmem:[%s121 + $0xa0] sm:$0xff]
        %v146 = vld [vmem:[%s121 + $0xc0] sm:$0xff]
        %v147 = vld [vmem:[%s121 + $0xe0] sm:$0xff]
        %148 = vadd.xlane.f32.xlu0 %v140
        %v149 = vpop.xlane.xlu0 %148
        %150 = vadd.xlane.f32.xlu0 %v141
        %v151 = vpop.xlane.xlu0 %150
        %152 = vadd.xlane.f32.xlu0 %v142
        %v153 = vpop.xlane.xlu0 %152
        %154 = vadd.xlane.f32.xlu0 %v143
        %v155 = vpop.xlane.xlu0 %154
        %156 = vadd.xlane.f32.xlu0 %v144
        %v157 = vpop.xlane.xlu0 %156
        %158 = vadd.xlane.f32.xlu0 %v145
        %v159 = vpop.xlane.xlu0 %158
        %160 = vadd.xlane.f32.xlu0 %v146
        %v161 = vpop.xlane.xlu0 %160
        %162 = vadd.xlane.f32.xlu0 %v147
        %v163 = vpop.xlane.xlu0 %162
        %v164 = vld [vmem:[%s121 + $0x8] sm:$0xff]
        %v165 = vld [vmem:[%s121 + $0x28] sm:$0xff]
        %v166 = vld [vmem:[%s121 + $0x48] sm:$0xff]
        %v167 = vld [vmem:[%s121 + $0x68] sm:$0xff]
        %v168 = vld [vmem:[%s121 + $0x88] sm:$0xff]
        %v169 = vld [vmem:[%s121 + $0xa8] sm:$0xff]
        %v170 = vld [vmem:[%s121 + $0xc8] sm:$0xff]
        %v171 = vld [vmem:[%s121 + $0xe8] sm:$0xff]
        %172 = vadd.xlane.f32.xlu0 %v164
        %v173 = vpop.xlane.xlu0 %172
        %174 = vadd.xlane.f32.xlu0 %v165
        %v175 = vpop.xlane.xlu0 %174
        %176 = vadd.xlane.f32.xlu0 %v166
        %v177 = vpop.xlane.xlu0 %176
        %178 = vadd.xlane.f32.xlu0 %v167
        %v179 = vpop.xlane.xlu0 %178
        %180 = vadd.xlane.f32.xlu0 %v168
        %v181 = vpop.xlane.xlu0 %180
        %182 = vadd.xlane.f32.xlu0 %v169
        %v183 = vpop.xlane.xlu0 %182
        %184 = vadd.xlane.f32.xlu0 %v170
        %v185 = vpop.xlane.xlu0 %184
        %186 = vadd.xlane.f32.xlu0 %v171
        %v187 = vpop.xlane.xlu0 %186
        %v188 = vadd.f32 %v149, %v173
        %v189 = vadd.f32 %v151, %v175
        %v190 = vadd.f32 %v153, %v177
        %v191 = vadd.f32 %v155, %v179
        %v192 = vadd.f32 %v157, %v181
        %v193 = vadd.f32 %v159, %v183
        %v194 = vadd.f32 %v161, %v185
        %v195 = vadd.f32 %v163, %v187
        %v196 = vld [vmem:[%s121 + $0x10] sm:$0xff]
        %v197 = vld [vmem:[%s121 + $0x30] sm:$0xff]
        %v198 = vld [vmem:[%s121 + $0x50] sm:$0xff]
        %v199 = vld [vmem:[%s121 + $0x70] sm:$0xff]
        %v200 = vld [vmem:[%s121 + $0x90] sm:$0xff]
        %v201 = vld [vmem:[%s121 + $0xb0] sm:$0xff]
        %v202 = vld [vmem:[%s121 + $0xd0] sm:$0xff]
        %v203 = vld [vmem:[%s121 + $0xf0] sm:$0xff]
        %204 = vadd.xlane.f32.xlu0 %v196
        %v205 = vpop.xlane.xlu0 %204
        %206 = vadd.xlane.f32.xlu0 %v197
        %v207 = vpop.xlane.xlu0 %206
        %208 = vadd.xlane.f32.xlu0 %v198
        %v209 = vpop.xlane.xlu0 %208
        %210 = vadd.xlane.f32.xlu0 %v199
        %v211 = vpop.xlane.xlu0 %210
        %212 = vadd.xlane.f32.xlu0 %v200
        %v213 = vpop.xlane.xlu0 %212
        %214 = vadd.xlane.f32.xlu0 %v201
        %v215 = vpop.xlane.xlu0 %214
        %216 = vadd.xlane.f32.xlu0 %v202
        %v217 = vpop.xlane.xlu0 %216
        %218 = vadd.xlane.f32.xlu0 %v203
        %v219 = vpop.xlane.xlu0 %218
        %v220 = vadd.f32 %v188, %v205
        %v221 = vadd.f32 %v189, %v207
        %v222 = vadd.f32 %v190, %v209
        %v223 = vadd.f32 %v191, %v211
        %v224 = vadd.f32 %v192, %v213
        %v225 = vadd.f32 %v193, %v215
        %v226 = vadd.f32 %v194, %v217
        %v227 = vadd.f32 %v195, %v219
        %v228 = vld [vmem:[%s121 + $0x18] sm:$0xff]
        %v229 = vld [vmem:[%s121 + $0x38] sm:$0xff]
        %v230 = vld [vmem:[%s121 + $0x58] sm:$0xff]
        %v231 = vld [vmem:[%s121 + $0x78] sm:$0xff]
        %v232 = vld [vmem:[%s121 + $0x98] sm:$0xff]
        %v233 = vld [vmem:[%s121 + $0xb8] sm:$0xff]
        %v234 = vld [vmem:[%s121 + $0xd8] sm:$0xff]
        %v235 = vld [vmem:[%s121 + $0xf8] sm:$0xff]
        %236 = vadd.xlane.f32.xlu0 %v228
        %v237 = vpop.xlane.xlu0 %236
        %238 = vadd.xlane.f32.xlu0 %v229
        %v239 = vpop.xlane.xlu0 %238
        %240 = vadd.xlane.f32.xlu0 %v230
        %v241 = vpop.xlane.xlu0 %240
        %242 = vadd.xlane.f32.xlu0 %v231
        %v243 = vpop.xlane.xlu0 %242
        %244 = vadd.xlane.f32.xlu0 %v232
        %v245 = vpop.xlane.xlu0 %244
        %246 = vadd.xlane.f32.xlu0 %v233
        %v247 = vpop.xlane.xlu0 %246
        %248 = vadd.xlane.f32.xlu0 %v234
        %v249 = vpop.xlane.xlu0 %248
        %250 = vadd.xlane.f32.xlu0 %v235
        %v251 = vpop.xlane.xlu0 %250
        %v252 = vadd.f32 %v220, %v237
        %v253 = vadd.f32 %v221, %v239
        %v254 = vadd.f32 %v222, %v241
        %v255 = vadd.f32 %v223, %v243
        %v256 = vadd.f32 %v224, %v245
        %v257 = vadd.f32 %v225, %v247
        %v258 = vadd.f32 %v226, %v249
        %v259 = vadd.f32 %v227, %v251
        %v260 = vmul.f32 %v252, 0.001953125
        %v261 = vmul.f32 %v253, 0.001953125
        %v262 = vmul.f32 %v254, 0.001953125
        %v263 = vmul.f32 %v255, 0.001953125
        %v264 = vmul.f32 %v256, 0.001953125
        %v265 = vmul.f32 %v257, 0.001953125
        %v266 = vmul.f32 %v258, 0.001953125
        %v267 = vmul.f32 %v259, 0.001953125
        %v268 = vlaneseq
        %v269 = vand.u32 %v268, 127
        %v278 = vlaneseq
        %v279 = vshrl.u32 %v278, 7
        %v280 = vsub.s32 %v269, %v279
        %v281 = vrot.slane %v260, %v280
        %v282 = vadd.s32 %v269, 4294967288
        %v283 = vlaneseq
        %v284 = vshrl.u32 %v283, 7
        %v285 = vsub.s32 %v282, %v284
        %v286 = vrot.slane %v261, %v285
        %vm287 = vcmask 130112
        %v288 = vsel %vm287, %v286, %v281
        %v289 = vadd.s32 %v269, 4294967280
        %v290 = vlaneseq
        %v291 = vshrl.u32 %v290, 7
        %v292 = vsub.s32 %v289, %v291
        %v293 = vrot.slane %v262, %v292
        %vm294 = vcmask 195712
        %v295 = vsel %vm294, %v293, %v288
        %v296 = vadd.s32 %v269, 4294967272
        %v297 = vlaneseq
        %v298 = vshrl.u32 %v297, 7
        %v299 = vsub.s32 %v296, %v298
        %v300 = vrot.slane %v263, %v299
        %vm301 = vcmask 261312
        %v302 = vsel %vm301, %v300, %v295
        %v303 = vadd.s32 %v269, 4294967264
        %v304 = vlaneseq
        %v305 = vshrl.u32 %v304, 7
        %v306 = vsub.s32 %v303, %v305
        %v307 = vrot.slane %v264, %v306
        %vm308 = vcmask 326912
        %v309 = vsel %vm308, %v307, %v302
        %v310 = vadd.s32 %v269, 4294967256
        %v311 = vlaneseq
        %v312 = vshrl.u32 %v311, 7
        %v313 = vsub.s32 %v310, %v312
        %v314 = vrot.slane %v265, %v313
        %vm315 = vcmask 392512
        %v316 = vsel %vm315, %v314, %v309
        %v317 = vadd.s32 %v269, 4294967248
        %v318 = vlaneseq
        %v319 = vshrl.u32 %v318, 7
        %v320 = vsub.s32 %v317, %v319
        %v321 = vrot.slane %v266, %v320
        %vm322 = vcmask 458112
        %v323 = vsel %vm322, %v321, %v316
        %v324 = vadd.s32 %v269, 4294967240
        %v325 = vlaneseq
        %v326 = vshrl.u32 %v325, 7
        %v327 = vsub.s32 %v324, %v326
        %v328 = vrot.slane %v267, %v327
        %vm329 = vcmask 523712
        %v330 = vsel %vm329, %v328, %v323
        %vm332 = vcmask 1048064
        %333 = vrot.lane.b32.xlu0 %v330, 64
        %v334 = vpop.permute.xlu0 %333
        %v335 = vsel %vm332, %v334, %v330
        %336 = vrot.lane.b32.xlu0 %v335, 64
        %v337 = vpop.permute.xlu0 %336
        %v338 = vsel %vm332, %v337, %v330
        %v339 = vadd.s32 %v269, 4294967291
        %vm340 = vcmp.ge.s32.totalorder %v339, 0
        %vm341 = vcmp.lt.s32.totalorder %v339, 64
        %vm342 = vmand %vm340, %vm341
        %s343 = sld [smem:[#allocation3]]
        %345 = vrot.lane.b32.xlu0 %v338, 69
        %v346 = vpop.permute.xlu0 %345
        %v348 = vsel %vm342, %v346, 0.0
        %v349 = vstv %s343
        %v350 = vmul.f32 %v349, %v348
        %v351 = vadd.f32 %v350, 0.0
        %v352 = vadd.s32 %v269, 4294967292
        %vm353 = vcmp.ge.s32.totalorder %v352, 0
        %vm354 = vcmp.lt.s32.totalorder %v352, 64
        %vm355 = vmand %vm353, %vm354
        %s356 = sld [smem:[#allocation3 + $0x1]]
        %357 = vrot.lane.b32.xlu0 %v338, 68
        %v358 = vpop.permute.xlu0 %357
        %v360 = vsel %vm355, %v358, 0.0
        %v361 = vstv %s356
        %v362 = vmul.f32 %v361, %v360
        %v363 = vadd.f32 %v351, %v362
        %v364 = vadd.s32 %v269, 4294967293
        %vm365 = vcmp.ge.s32.totalorder %v364, 0
        %vm366 = vcmp.lt.s32.totalorder %v364, 64
        %vm367 = vmand %vm365, %vm366
        %s368 = sld [smem:[#allocation3 + $0x2]]
        %369 = vrot.lane.b32.xlu0 %v338, 67
        %v370 = vpop.permute.xlu0 %369
        %v372 = vsel %vm367, %v370, 0.0
        %v373 = vstv %s368
        %v374 = vmul.f32 %v373, %v372
        %v375 = vadd.f32 %v363, %v374
        %v376 = vadd.s32 %v269, 4294967294
        %vm377 = vcmp.ge.s32.totalorder %v376, 0
        %vm378 = vcmp.lt.s32.totalorder %v376, 64
        %vm379 = vmand %vm377, %vm378
        %s380 = sld [smem:[#allocation3 + $0x3]]
        %381 = vrot.lane.b32.xlu0 %v338, 66
        %v382 = vpop.permute.xlu0 %381
        %v384 = vsel %vm379, %v382, 0.0
        %v385 = vstv %s380
        %v386 = vmul.f32 %v385, %v384
        %v387 = vadd.f32 %v375, %v386
        %v388 = vadd.s32 %v269, 4294967295
        %vm389 = vcmp.ge.s32.totalorder %v388, 0
        %vm390 = vcmp.lt.s32.totalorder %v388, 64
        %vm391 = vmand %vm389, %vm390
        %s392 = sld [smem:[#allocation3 + $0x4]]
        %393 = vrot.lane.b32.xlu0 %v338, 65
        %v394 = vpop.permute.xlu0 %393
        %v396 = vsel %vm391, %v394, 0.0
        %v397 = vstv %s392
        %v398 = vmul.f32 %v397, %v396
        %v399 = vadd.f32 %v387, %v398
        %vm400 = vcmp.ge.s32.totalorder %v269, 0
        %vm401 = vcmp.lt.s32.totalorder %v269, 64
        %vm402 = vmand %vm400, %vm401
        %s403 = sld [smem:[#allocation3 + $0x5]]
        %404 = vrot.lane.b32.xlu0 %v338, 64
        %v405 = vpop.permute.xlu0 %404
        %v407 = vsel %vm402, %v405, 0.0
        %v408 = vstv %s403
        %v409 = vmul.f32 %v408, %v407
        %v410 = vadd.f32 %v399, %v409
        %v411 = vadd.s32 %v269, 1
        %vm412 = vcmp.ge.s32.totalorder %v411, 0
        %vm413 = vcmp.lt.s32.totalorder %v411, 64
        %vm414 = vmand %vm412, %vm413
        %s415 = sld [smem:[#allocation3 + $0x6]]
        %416 = vrot.lane.b32.xlu0 %v338, 127
        %v417 = vpop.permute.xlu0 %416
        %v419 = vsel %vm414, %v417, 0.0
        %v420 = vstv %s415
        %v421 = vmul.f32 %v420, %v419
        %v422 = vadd.f32 %v410, %v421
        %v423 = vadd.s32 %v269, 2
        %vm424 = vcmp.ge.s32.totalorder %v423, 0
        %vm425 = vcmp.lt.s32.totalorder %v423, 64
        %vm426 = vmand %vm424, %vm425
        %s427 = sld [smem:[#allocation3 + $0x7]]
        %428 = vrot.lane.b32.xlu0 %v338, 126
        %v429 = vpop.permute.xlu0 %428
        %v431 = vsel %vm426, %v429, 0.0
        %v432 = vstv %s427
        %v433 = vmul.f32 %v432, %v431
        %v434 = vadd.f32 %v422, %v433
        %v435 = vadd.s32 %v269, 3
        %vm436 = vcmp.ge.s32.totalorder %v435, 0
        %vm437 = vcmp.lt.s32.totalorder %v435, 64
        %vm438 = vmand %vm436, %vm437
        %s439 = sld [smem:[#allocation3 + $0x8]]
        %440 = vrot.lane.b32.xlu0 %v338, 125
        %v441 = vpop.permute.xlu0 %440
        %v443 = vsel %vm438, %v441, 0.0
        %v444 = vstv %s439
        %v445 = vmul.f32 %v444, %v443
        %v446 = vadd.f32 %v434, %v445
        %v447 = vadd.s32 %v269, 4
        %vm448 = vcmp.ge.s32.totalorder %v447, 0
        %vm449 = vcmp.lt.s32.totalorder %v447, 64
        %vm450 = vmand %vm448, %vm449
        %s451 = sld [smem:[#allocation3 + $0x9]]
        %452 = vrot.lane.b32.xlu0 %v338, 124
        %v453 = vpop.permute.xlu0 %452
        %v455 = vsel %vm450, %v453, 0.0
        %v456 = vstv %s451
        %v457 = vmul.f32 %v456, %v455
        %v458 = vadd.f32 %v446, %v457
        %v459 = vadd.s32 %v269, 5
        %vm460 = vcmp.ge.s32.totalorder %v459, 0
        %vm461 = vcmp.lt.s32.totalorder %v459, 64
        %vm462 = vmand %vm460, %vm461
        %s463 = sld [smem:[#allocation3 + $0xa]]
        %464 = vrot.lane.b32.xlu0 %v338, 123
        %v465 = vpop.permute.xlu0 %464
        %v467 = vsel %vm462, %v465, 0.0
        %v468 = vstv %s463
        %v469 = vmul.f32 %v468, %v467
        %v470 = vadd.f32 %v458, %v469
        %v471 = vxor.u32 %v470, 2147483648
        %v472 = vmul.f32 %v471, 1.442695
        %v473 = vpow.pop %v472
        %v474 = vadd.f32 %v473, 1.0
        %v475 = vrcp.pop %v474
        %v476 = vmul.f32 1.0, %v475
        %v477 = vld [vmem:[%s121] sm:$0xff]
        %v478 = vld [vmem:[%s121 + $0x8] sm:$0xff]
        %v479 = vld [vmem:[%s121 + $0x10] sm:$0xff]
        %v480 = vld [vmem:[%s121 + $0x20] sm:$0xff]
        %v481 = vld [vmem:[%s121 + $0x28] sm:$0xff]
        %v482 = vld [vmem:[%s121 + $0x30] sm:$0xff]
        %v483 = vld [vmem:[%s121 + $0x40] sm:$0xff]
        %v484 = vld [vmem:[%s121 + $0x48] sm:$0xff]
        %v485 = vld [vmem:[%s121 + $0x50] sm:$0xff]
        %v486 = vld [vmem:[%s121 + $0x60] sm:$0xff]
        %v487 = vld [vmem:[%s121 + $0x68] sm:$0xff]
        %v488 = vld [vmem:[%s121 + $0x70] sm:$0xff]
        %v489 = vld [vmem:[%s121 + $0x80] sm:$0xff]
        %v490 = vld [vmem:[%s121 + $0x88] sm:$0xff]
        %v491 = vld [vmem:[%s121 + $0x90] sm:$0xff]
        %v492 = vld [vmem:[%s121 + $0xa0] sm:$0xff]
        %v493 = vld [vmem:[%s121 + $0xa8] sm:$0xff]
        %v494 = vld [vmem:[%s121 + $0xb0] sm:$0xff]
        %v495 = vld [vmem:[%s121 + $0xc0] sm:$0xff]
        %v496 = vld [vmem:[%s121 + $0xc8] sm:$0xff]
        %v497 = vld [vmem:[%s121 + $0xd0] sm:$0xff]
        %v498 = vld [vmem:[%s121 + $0xe0] sm:$0xff]
        %v499 = vld [vmem:[%s121 + $0xe8] sm:$0xff]
        %v500 = vld [vmem:[%s121 + $0xf0] sm:$0xff]
        %v501 = vlaneseq
        %v502 = vshrl.u32 %v501, 7
        %v503 = vsub.s32 0, %v502
        %v504 = vrot.slane %v476, %v503
        %506 = vbcast.lane.b32.xlu0 %v504, 256
        %v507 = vpop.permute.xlu0 %506
        %s509 = sor.u32 256, 8
        %510 = vbcast.lane.b32.xlu0 %v504, %s509
        %v511 = vpop.permute.xlu0 %510
        %s513 = sor.u32 256, 16
        %514 = vbcast.lane.b32.xlu0 %v504, %s513
        %v515 = vpop.permute.xlu0 %514
        %s517 = sor.u32 256, 24
        %518 = vbcast.lane.b32.xlu0 %v504, %s517
        %v519 = vpop.permute.xlu0 %518
        %s521 = sor.u32 256, 32
        %522 = vbcast.lane.b32.xlu0 %v504, %s521
        %v523 = vpop.permute.xlu0 %522
        %s525 = sor.u32 256, 40
        %526 = vbcast.lane.b32.xlu0 %v504, %s525
        %v527 = vpop.permute.xlu0 %526
        %s529 = sor.u32 256, 48
        %530 = vbcast.lane.b32.xlu0 %v504, %s529
        %v531 = vpop.permute.xlu0 %530
        %s533 = sor.u32 256, 56
        %534 = vbcast.lane.b32.xlu0 %v504, %s533
        %v535 = vpop.permute.xlu0 %534
        %v536 = vmul.f32 %v477, %v507
        %v537 = vmul.f32 %v478, %v507
        %v538 = vmul.f32 %v479, %v507
        %v539 = vmul.f32 %v228, %v507
        %v540 = vmul.f32 %v480, %v511
        %v541 = vmul.f32 %v481, %v511
        %v542 = vmul.f32 %v482, %v511
        %v543 = vmul.f32 %v229, %v511
        %v544 = vmul.f32 %v483, %v515
        %v545 = vmul.f32 %v484, %v515
        %v546 = vmul.f32 %v485, %v515
        %v547 = vmul.f32 %v230, %v515
        %v548 = vmul.f32 %v486, %v519
        %v549 = vmul.f32 %v487, %v519
        %v550 = vmul.f32 %v488, %v519
        %v551 = vmul.f32 %v231, %v519
        %v552 = vmul.f32 %v489, %v523
        %v553 = vmul.f32 %v490, %v523
        %v554 = vmul.f32 %v491, %v523
        %v555 = vmul.f32 %v232, %v523
        %v556 = vmul.f32 %v492, %v527
        %v557 = vmul.f32 %v493, %v527
        %v558 = vmul.f32 %v494, %v527
        %v559 = vmul.f32 %v233, %v527
        %v560 = vmul.f32 %v495, %v531
        %v561 = vmul.f32 %v496, %v531
        %v562 = vmul.f32 %v497, %v531
        %v563 = vmul.f32 %v234, %v531
        %v564 = vmul.f32 %v498, %v535
        %v565 = vmul.f32 %v499, %v535
        %v566 = vmul.f32 %v500, %v535
        %v567 = vmul.f32 %v235, %v535
        %568 = vst [vmem:[%s139] sm:$0xff] %v536
        %569 = vst [vmem:[%s139 + $0x8] sm:$0xff] %v537
        %570 = vst [vmem:[%s139 + $0x10] sm:$0xff] %v538
        %571 = vst [vmem:[%s139 + $0x18] sm:$0xff] %v539
        %572 = vst [vmem:[%s139 + $0x20] sm:$0xff] %v540
        %573 = vst [vmem:[%s139 + $0x28] sm:$0xff] %v541
        %574 = vst [vmem:[%s139 + $0x30] sm:$0xff] %v542
        %575 = vst [vmem:[%s139 + $0x38] sm:$0xff] %v543
        %576 = vst [vmem:[%s139 + $0x40] sm:$0xff] %v544
        %577 = vst [vmem:[%s139 + $0x48] sm:$0xff] %v545
        %578 = vst [vmem:[%s139 + $0x50] sm:$0xff] %v546
        %579 = vst [vmem:[%s139 + $0x58] sm:$0xff] %v547
        %580 = vst [vmem:[%s139 + $0x60] sm:$0xff] %v548
        %581 = vst [vmem:[%s139 + $0x68] sm:$0xff] %v549
        %582 = vst [vmem:[%s139 + $0x70] sm:$0xff] %v550
        %583 = vst [vmem:[%s139 + $0x78] sm:$0xff] %v551
        %584 = vst [vmem:[%s139 + $0x80] sm:$0xff] %v552
        %585 = vst [vmem:[%s139 + $0x88] sm:$0xff] %v553
        %586 = vst [vmem:[%s139 + $0x90] sm:$0xff] %v554
        %587 = vst [vmem:[%s139 + $0x98] sm:$0xff] %v555
        %588 = vst [vmem:[%s139 + $0xa0] sm:$0xff] %v556
        %589 = vst [vmem:[%s139 + $0xa8] sm:$0xff] %v557
        %590 = vst [vmem:[%s139 + $0xb0] sm:$0xff] %v558
        %591 = vst [vmem:[%s139 + $0xb8] sm:$0xff] %v559
        %592 = vst [vmem:[%s139 + $0xc0] sm:$0xff] %v560
        %593 = vst [vmem:[%s139 + $0xc8] sm:$0xff] %v561
        %594 = vst [vmem:[%s139 + $0xd0] sm:$0xff] %v562
        %595 = vst [vmem:[%s139 + $0xd8] sm:$0xff] %v563
        %596 = vst [vmem:[%s139 + $0xe0] sm:$0xff] %v564
        %597 = vst [vmem:[%s139 + $0xe8] sm:$0xff] %v565
        %598 = vst [vmem:[%s139 + $0xf0] sm:$0xff] %v566
        %599 = vst [vmem:[%s139 + $0xf8] sm:$0xff] %v567
        %s600 = sand.u32 %s57, 1
        %s601 = scalar_lea.sflag [#allocation6], %s600
        %s602 = sand.u32 %s57, 1
        %s603 = smul.addr %s602, 256
        %s604 = scalar_lea.vmem [#allocation7], %s603
        // Predicated region
        $region29: #{tpu_custom_call.1} parent=23 // pred_check
          %p605 = pneg %p67
        $region30: #{tpu_custom_call.1} parent=23 // pred_check_branch
          %607 = sbr.rel (%p605) target = $region32
        $region31: #{tpu_custom_call.1} parent=23 // pred_region
          %s609 = ssub.s32 4096, 4096
          %610 = vsyncadd %s601, %s609
          %s611 = smul.addr %s23, 32
          %s612 = smul.addr %s611, 128
          %s613 = scalar_lea.hbm %s2, %s612
          %s614 = sshll.u32 %s604, 4
          %s615 = int_to_ptr.vmem [resolvable:$true] %s614
          %620 = dma.vmem_to_hbm [thread:$0]  %s615, 4096, %s613, %s601, 512, 512, 32
        $region32: #{tpu_custom_call.1} parent=23 // pred_fallthru
          _
      $region24: #{tpu_custom_call.1} parent=5 // pred_fallthru
        _
      %p621 = scmp.le.s32.totalorder 2, %s18
      // Predicated region
      $region33: #{tpu_custom_call.1} parent=5 // pred_check
        %p622 = pneg %p621
      $region34: #{tpu_custom_call.1} parent=5 // pred_check_branch
        %624 = sbr.rel (%p622) target = $region36
      $region35: #{tpu_custom_call.1} parent=5 // pred_region
        %s625 = ssub.s32 %s18, 2
        // Predicated region
        $region37: #{tpu_custom_call.1} parent=35 // pred_check
          %p626 = pneg %p73
        $region38: #{tpu_custom_call.1} parent=35 // pred_check_branch
          %628 = sbr.rel (%p626) target = $region40
        $region39: #{tpu_custom_call.1} parent=35 // pred_region
          %s629 = sand.u32 %s58, 1
          %s630 = scalar_lea.sflag [#allocation6], %s629
          %s631 = sand.u32 %s58, 1
          %s632 = smul.addr %s631, 256
          %s633 = scalar_lea.vmem [#allocation7], %s632
          %634 = dma.done %s630, 4096
        $region40: #{tpu_custom_call.1} parent=35 // pred_fallthru
          _
      $region36: #{tpu_custom_call.1} parent=5 // pred_fallthru
        _
    $region6: #{tpu_custom_call.1} parent=1 // loop_footer
      %s22 = sadd.s32 1, %s18
    $region7: #{tpu_custom_call.1} parent=1 // loop_footer_branch
      %17 = sbr.rel target = $region3
    $region8: #{tpu_custom_call.1} parent=1 // loop_exit
      _
    %635 = vsyncpa [#allocation5], 1
    %s636 = scalar_lea.sflag [#allocation5], 1
    %637 = vsyncpa %s636, 1
    %638 = vsyncpa [#allocation6], 1
    %s639 = scalar_lea.sflag [#allocation6], 1
    %640 = vsyncpa %s639, 1

</llo_original>
